<compile_context>
chip_gen: v6e
topology: v6e:2x2x1
jax: 0.10.0
libtpu: 0.0.40
codegen_flags: <defaults>
</compile_context>

<pallas_src>
import jax
import jax.numpy as jnp
from jax.experimental import pallas as pl
from jax.experimental.pallas import tpu as pltpu


def _zero_kernel(x_ref, o_ref):
    # Elementwise multiply by 0.0 (NOT a constant fill: keeps NaN*0 = NaN and
    # Inf*0 = NaN, exactly like torch.Tensor.mul(0.0), and preserves dtype).
    o_ref[...] = x_ref[...] * jnp.asarray(0.0, dtype=x_ref.dtype)


def _device_kind():
    try:
        return jax.devices()[0].device_kind.lower()
    except Exception:  # pragma: no cover - e.g. no devices during tracing
        return ""


def _block_config():
    """(block_bytes, vmem_limit_bytes or None) tuned per TPU generation."""
    kind = _device_kind()
    if "v7" in kind:
        # v7x: 3.2 TB/s HBM -> bigger blocks amortize the ~0.35 us/step cost;
        # only 64 MiB physical VMEM per TC, so 2 arrays x 2 buffers x 8 MiB
        # (= 32 MiB live) needs an explicit limit above the 32 MiB default.
        return 8 << 20, 48 << 20
    if "v6" in kind or "trillium" in kind:
        # v6e: 4 MiB blocks -> 16 MiB live; raise the limit for headroom.
        return 4 << 20, 40 << 20
    # v5e (16 MiB default scoped VMEM) and anything unknown: 2 MiB blocks
    # -> 8 MiB live, safely under the default scoped budget.
    return 2 << 20, None


def _auto_gate_bytes():
    """Below this, XLA's fused elementwise beats pallas_call overhead."""
    return (8 << 20) if "v7" in _device_kind() else (4 << 20)


def _pick_lane_width(total):
    """Largest multiple of 128 (<= 4096) that divides `total`, else None."""
    for lanes in range(4096, 127, -128):
        if total % lanes == 0:
            return lanes
    return None


def _zero_pallas_2d(x2, *, donate=False):
    """x2 * 0.0 for a 2-D lane-dense (rows, lanes) view via a tiled grid."""
    rows, lanes = x2.shape
    itemsize = x2.dtype.itemsize
    # Native sublane pack: 8 rows for f32, 16 for bf16, 32 for int8/fp8.
    pack = max(8, 32 // max(1, itemsize))

    block_bytes, vmem_limit = _block_config()
    target_elems = max(1, block_bytes // itemsize)
    tm = max(1, min(rows, target_elems // max(1, lanes)))

    total_bytes = rows * lanes * itemsize
    if total_bytes >= (2 << 20):
        # Ensure >= ~8 grid steps so double-buffering overlaps DMA with the
        # store stream and both v7x TensorCores get several blocks each.
        tm = min(tm, max(pack, -(-rows // 8)))
    if tm < rows:
        tm = max(pack, (tm // pack) * pack)  # sublane-pack aligned blocks
        tm = min(tm, rows)
    grid = (pl.cdiv(rows, tm),)

    n = rows * lanes
    cp_kwargs = dict(dimension_semantics=("parallel",))
    if vmem_limit is not None:
        cp_kwargs["vmem_limit_bytes"] = int(vmem_limit)

    return pl.pallas_call(
        _zero_kernel,
        out_shape=jax.ShapeDtypeStruct((rows, lanes), x2.dtype),
        grid=grid,
        in_specs=[pl.BlockSpec((tm, lanes), lambda i: (i, 0))],
        out_specs=pl.BlockSpec((tm, lanes), lambda i: (i, 0)),
        input_output_aliases={0: 0} if donate else {},
        compiler_params=pltpu.CompilerParams(**cp_kwargs),
        cost_estimate=pl.CostEstimate(
            flops=n, transcendentals=0, bytes_accessed=2 * n * itemsize),
    )(x2)


def _zero_lane_dense(x, *, donate=False):
    """x * 0.0 via the lane-dense tiled Pallas kernel (lane-friendly sizes)."""
    shape, total = x.shape, x.size
    lanes = _pick_lane_width(total)
    if lanes is None:
        # Ragged size (not a multiple of 128): padding + trimming would add
        # 2-3x HBM traffic for a memory-bound op; let XLA fuse the multiply.
        return x * jnp.asarray(0.0, dtype=x.dtype)
    flat = x.reshape(-1)                      # contiguous -> zero-copy reshape
    rows = total // lanes
    out2 = _zero_pallas_2d(flat.reshape(rows, lanes), donate=donate)
    return out2.reshape(shape)


def zero_forward(x, stride, *, use_pallas=None, donate_input=False,
                 strict_ieee=True):
    """Forward pass of `Zero`.

    Args:
      x: (N, C, D, H, W) array.
      stride: 1 or 2. If 2, the last three axes are subsampled with step 2.
      use_pallas: None -> auto (Pallas only for large, non-subsampled tensors);
        True/False forces the choice.
      donate_input: if True (and the caller actually donates x at the jit
        boundary), alias the input buffer as the output (in-place write,
        saves an HBM allocation). Otherwise XLA inserts a harmless copy.
      strict_ieee: if True (default) keep exact mul(0.0) semantics
        (NaN/Inf -> NaN, -x -> -0.0). If False, emit a pure write (no input
        read): half the HBM traffic, but constant +0.0 everywhere.
    """
    subsampled = False
    if stride == 2:
        # TODO(synk): the W (lane-dim) stride-2 gather has no clean/portable
        # in-kernel Pallas TPU lowering (needs a lane-compaction shuffle), so
        # the D/H/W subsample stays an XLA strided-slice producer.
        x = x[:, :, ::2, ::2, ::2]
        subsampled = True

    if not strict_ieee:
        # Write-only fast path: no read of x at all (opt-in, changes NaN/Inf
        # and -0.0 behavior vs. torch.mul(0.0)).
        return jnp.zeros(x.shape, dtype=x.dtype)

    if use_pallas is None:
        # For the subsampled path, leave slice+mul to XLA so they fuse into a
        # single strided-read / dense-write op (routing through Pallas would
        # materialize the 1/8-size tensor and re-stream it: ~2x traffic).
        # Below the gate, pallas_call launch + per-step overhead dominates.
        use_pallas = (not subsampled) and (
            x.size * x.dtype.itemsize >= _auto_gate_bytes())
    if not use_pallas:
        return x * jnp.asarray(0.0, dtype=x.dtype)

    return _zero_lane_dense(x, donate=donate_input)


if __name__ == "__main__":
    key = jax.random.PRNGKey(0)

    # Small 5-D voxel input consistent with the Tab2Vox 3-D ops: (N, C, D, H, W)
    x = jax.random.normal(key, (2, 4, 8, 8, 8), dtype=jnp.float32)

    # stride == 2 path (subsample then zero) — force the Pallas path.
    y2 = zero_forward(x, stride=2, use_pallas=True)
    jax.block_until_ready(y2)
    assert y2.shape == (2, 4, 4, 4, 4), y2.shape
    assert y2.dtype == x.dtype
    assert bool(jnp.all(y2 == 0.0))

    # stride == 2, auto path (falls to the fused XLA slice+mul).
    y2a = zero_forward(x, stride=2)
    jax.block_until_ready(y2a)
    assert y2a.shape == (2, 4, 4, 4, 4)
    assert bool(jnp.all(y2a == 0.0))

    # stride == 1 path (zero only, shape preserved), forced Pallas.
    y1 = zero_forward(x, stride=1, use_pallas=True)
    jax.block_until_ready(y1)
    assert y1.shape == x.shape
    assert y1.dtype == x.dtype
    assert bool(jnp.all(y1 == 0.0))

    # mul(0.0) semantics: NaN propagates (this is not a constant fill).
    x_nan = x.at[0, 0, 0, 0, 0].set(jnp.nan)
    yn = zero_forward(x_nan, stride=1, use_pallas=True)
    jax.block_until_ready(yn)
    assert bool(jnp.isnan(yn[0, 0, 0, 0, 0]))
    assert int(jnp.sum(jnp.isnan(yn))) == 1
    assert bool(jnp.all(jnp.nan_to_num(yn) == 0.0))

    # Opt-in write-only path (no input read): NaN is NOT propagated.
    yf = zero_forward(x_nan, stride=1, strict_ieee=False)
    jax.block_until_ready(yf)
    assert bool(jnp.all(yf == 0.0))

    # Larger input (8 MiB) to exercise the multi-block tiled grid (>= 8 blocks
    # of 4096 lanes on every generation) and the auto size gate.
    xb = jax.random.normal(jax.random.PRNGKey(1), (4, 16, 16, 32, 64),
                           dtype=jnp.float32)
    yb = zero_forward(xb, stride=1, use_pallas=True)
    jax.block_until_ready(yb)
    assert yb.shape == xb.shape
    assert bool(jnp.all(yb == 0.0))

    # bf16 path (sublane pack = 16).
    xh = jax.random.normal(jax.random.PRNGKey(2), (4, 16, 16, 32, 64),
                           dtype=jnp.bfloat16)
    yh = zero_forward(xh, stride=1, use_pallas=True)
    jax.block_until_ready(yh)
    assert yh.dtype == jnp.bfloat16
    assert bool(jnp.all(yh == 0.0))

    print("KERNEL_OK")
</pallas_src>

<mosaic_0001>
module attributes {stable_mosaic.version = 11 : i64} {
  func.func @_zero_kernel(%arg0: i32, %arg1: memref<1x512xf32, #tpu.memory_space<vmem>>, %arg2: memref<1x512xf32, #tpu.memory_space<vmem>>) attributes {dimension_semantics = [#tpu.dimension_semantics<parallel>], iteration_bounds = array<i64: 1>, scalar_prefetch = 0 : i64, scratch_operands = 0 : i64, tpu.core_type = #tpu.core_type<tc>, window_params = [{transform_indices = @transform_0, window_bounds = array<i64: 1, 512>}, {transform_indices = @transform_1, window_bounds = array<i64: 1, 512>}]} {
    %c0 = arith.constant 0 : index
    %c0_0 = arith.constant 0 : index
    %0 = vector.load %arg1[%c0, %c0_0] : memref<1x512xf32, #tpu.memory_space<vmem>>, vector<1x512xf32>
    %cst = arith.constant 0.000000e+00 : f32
    %1 = vector.broadcast %cst : f32 to vector<1x512xf32>
    %2 = arith.mulf %0, %1 : vector<1x512xf32>
    %c0_1 = arith.constant 0 : index
    %c0_2 = arith.constant 0 : index
    %3 = vector.load %arg2[%c0_1, %c0_2] : memref<1x512xf32, #tpu.memory_space<vmem>>, vector<1x512xf32>
    tpu.vector_store %arg2[%c0_1, %c0_2], %2 {strides = array<i32>} : memref<1x512xf32, #tpu.memory_space<vmem>>, vector<1x512xf32>,
    return
  }
  func.func @transform_0(%arg0: i32) -> (i32, i32) {
    %c0_i32 = arith.constant 0 : i32
    %c0_i32_0 = arith.constant 0 : i32
    return %arg0, %c0_i32 : i32, i32
  }
  func.func @transform_1(%arg0: i32) -> (i32, i32) {
    %c0_i32 = arith.constant 0 : i32
    %c0_i32_0 = arith.constant 0 : i32
    return %arg0, %c0_i32 : i32, i32
  }
}

</mosaic_0001>

<llo_original>
// kernel: tpu_custom_call.1
$region0: #{tpu_custom_call.1}
  #allocation0 [shape = 'u32[]', space=smem, size = 0x4, offset = 0x4, fixed_abs, tag = 'smem constant byte address 0x4 - core index']
  #allocation1 [shape = 'u32[144,128]{1,0:T(1,128)}', space=vmem, size = 0x12000, scoped, tag = 'internal scratch']
  %s0 = inlined_call_operand.hbm [shape: f32[1,512], index: 0, kind: input, shape index: {}]
  %s1 = inlined_call_operand.hbm [shape: f32[1,512], index: 1, kind: output, shape index: {}]
  %s2 = sld [smem:[#allocation0]]
  $region18: #{tpu_custom_call.1} parent=0
    _
  %s4 = ssub.s32 1, %s2
  %s5 = scalar_select 0, %s4, %s2
  $region1: #{tpu_custom_call.1} parent=0
    #allocation2 [shape = 'u8[2048]{0}', space=vmem, size = 0x800, scoped, tag = 'input window, operand 0, single buffered']
    #allocation3 [shape = 's32[1]{0}', space=sflag, size = 0x4, scoped, tag = 'scoped memory for tpu_custom_call.1']
    #allocation4 [shape = 's32[1]{0}', space=sflag, size = 0x4, scoped, tag = 'scoped memory for tpu_custom_call.1']
    #allocation5 [shape = 'u8[2048]{0}', space=vmem, size = 0x800, scoped, tag = 'output window, operand 0, single buffered']
    %6 = vsyncpa [#allocation3], 0
    %7 = vsyncpa [#allocation4], 0
    // Predicated region
    $region2: #{tpu_custom_call.1} parent=1 // pred_check
      _
    $region3: #{tpu_custom_call.1} parent=1 // pred_check_branch
      %9 = sbr.rel (0) target = $region5
    $region4: #{tpu_custom_call.1} parent=1 // pred_region
      %s11 = ssub.s32 64, 64
      %12 = vsyncadd [#allocation3], %s11
      %s14 = sshll.u32 [#allocation2], 4
      %s15 = int_to_ptr.vmem [resolvable:$true] %s14
      %17 = dma.hbm_to_vmem [thread:$0]  %s0, 64, %s15, [#allocation3]
    $region5: #{tpu_custom_call.1} parent=1 // pred_fallthru
      _
    // Predicated region
    $region6: #{tpu_custom_call.1} parent=1 // pred_check
      _
    $region7: #{tpu_custom_call.1} parent=1 // pred_check_branch
      %19 = sbr.rel (0) target = $region9
    $region8: #{tpu_custom_call.1} parent=1 // pred_region
      %20 = dma.done [#allocation3], 64
    $region9: #{tpu_custom_call.1} parent=1 // pred_fallthru
      _
    %v21 = vld [vmem:[#allocation2] sm:$0xf]
    %v22 = vmul.f32 %v21, 0.0
    %v23 = vlaneseq
    %vm24 = vcmp.ge.s32.totalorder %v23, 0
    %vm25 = vcmp.lt.s32.totalorder %v23, 512
    %vm26 = vmand %vm24, %vm25
    %27 = vst.msk [vmem:[#allocation5] sm:$0xf] %vm26, %v22
    // Predicated region
    $region10: #{tpu_custom_call.1} parent=1 // pred_check
      _
    $region11: #{tpu_custom_call.1} parent=1 // pred_check_branch
      %29 = sbr.rel (0) target = $region13
    $region12: #{tpu_custom_call.1} parent=1 // pred_region
      %s31 = ssub.s32 64, 64
      %32 = vsyncadd [#allocation4], %s31
      %s34 = sshll.u32 [#allocation5], 4
      %s35 = int_to_ptr.vmem [resolvable:$true] %s34
      %37 = dma.vmem_to_hbm [thread:$0]  %s35, 64, %s1, [#allocation4]
    $region13: #{tpu_custom_call.1} parent=1 // pred_fallthru
      _
    // Predicated region
    $region14: #{tpu_custom_call.1} parent=1 // pred_check
      _
    $region15: #{tpu_custom_call.1} parent=1 // pred_check_branch
      %39 = sbr.rel (0) target = $region17
    $region16: #{tpu_custom_call.1} parent=1 // pred_region
      %40 = dma.done [#allocation4], 64
    $region17: #{tpu_custom_call.1} parent=1 // pred_fallthru
      _
    %41 = vsyncpa [#allocation3], 1
    %42 = vsyncpa [#allocation4], 1

</llo_original>
